<compile_context>
chip_gen: v6e
topology: v6e:2x2x1
jax: 0.10.0
libtpu: 0.0.40
codegen_flags: <defaults>
</compile_context>

<pallas_src>
import jax
import jax.numpy as jnp
from jax.experimental import pallas as pl
from jax.experimental.pallas import tpu as pltpu


def _round_up(x, m):
    return ((x + m - 1) // m) * m


# ----------------------------------------------------------------------------
# Kernel: one batch tile of the fused 3-layer MLP.
# ----------------------------------------------------------------------------
def _mlp_kernel(x_ref, w1_ref, b1_ref, w2_ref, b2_ref, w3_ref, b3_ref, o_ref):
    # f32 -> bf16 cast happens here on the VPU (free slack) instead of as a
    # separate XLA pass in HBM.
    x = x_ref[...].astype(jnp.bfloat16)                       # (TB, in) bf16

    h1 = jnp.dot(x, w1_ref[...], preferred_element_type=jnp.float32)
    h1 = jnp.maximum(h1 + b1_ref[...], 0.0)                   # f32 VPU

    h2 = jnp.dot(h1.astype(jnp.bfloat16), w2_ref[...],
                 preferred_element_type=jnp.float32)
    h2 = jnp.maximum(h2 + b2_ref[...], 0.0)

    o = jnp.dot(h2.astype(jnp.bfloat16), w3_ref[...],
                preferred_element_type=jnp.float32) + b3_ref[...]
    o_ref[...] = o.astype(o_ref.dtype)                        # bf16 store


# ----------------------------------------------------------------------------
# Tiling / VMEM budgeting helpers.
# ----------------------------------------------------------------------------
def _pick_batch_tile(b, cap=4096):
    """Auto-scaled batch tile: multiple of 16, >=256 rows and ~8 grid steps
    for large batches (>=2 steps per v7x TensorCore), single step for small."""
    b16 = _round_up(max(b, 1), 16)
    if b16 <= 256:
        return b16
    tb = max(256, _round_up(b16 // 8, 16))
    return min(cap, tb)


def _vmem_limit_bytes(tb, in_size, hid, out_size):
    """Explicit scoped-VMEM budget (double-buffered IO + resident weights +
    intermediates), with generous headroom; capped below v7x's 64 MiB physical."""
    in_buf = 2 * tb * in_size * 4                 # f32 input, double buffered
    out_buf = 2 * tb * out_size * 2               # bf16 output, double buffered
    w_buf = 2 * ((in_size * hid + hid * hid + hid * out_size) * 2
                 + (2 * hid + out_size) * 4)      # bf16 W + f32 b, 2 buffers
    act = 4 * tb * hid * 4                        # f32 intermediates
    est = in_buf + out_buf + w_buf + act
    return int(min(max(2 * est + (4 << 20), 16 << 20), 48 << 20))


# ----------------------------------------------------------------------------
# One-time parameter preparation (hoisted out of the per-call path).
# ----------------------------------------------------------------------------
def prepare_params(params):
    """Cast weights to bf16 (MXU operands) and biases to f32 row vectors once."""
    return {
        "w1": params["w1"].astype(jnp.bfloat16),
        "b1": params["b1"].astype(jnp.float32).reshape(1, -1),
        "w2": params["w2"].astype(jnp.bfloat16),
        "b2": params["b2"].astype(jnp.float32).reshape(1, -1),
        "w3": params["w3"].astype(jnp.bfloat16),
        "b3": params["b3"].astype(jnp.float32).reshape(1, -1),
    }


# ----------------------------------------------------------------------------
# Forward pass.
# ----------------------------------------------------------------------------
def network_forward(x, prepared, *, batch_tile=None):
    """Forward pass of `Network` as one batch-tiled Pallas kernel.

    Args:
      x: (batch, *state_shape) float array; flattened to (batch, input_size)
         like nn.Flatten().
      prepared: output of prepare_params() — w1 (in,hid), b1 (1,hid),
                w2 (hid,hid), b2 (1,hid), w3 (hid,out), b3 (1,out).
                (in,out) layout is the transpose of PyTorch's Linear storage;
                semantics identical.
      batch_tile: optional override of rows per grid step (rounded to 16).

    Returns:
      (batch, out_size) bf16 logits (f32 MXU accumulation inside).
    """
    b = x.shape[0]
    x = x.reshape(b, -1).astype(jnp.float32)       # nn.Flatten, f32 stream
    in_size = x.shape[1]
    hid = prepared["w1"].shape[1]
    out_size = prepared["w3"].shape[1]

    # --- batch tiling (tb multiple of 16 for bf16 sublane packing) ----------
    if batch_tile is None:
        tb = _pick_batch_tile(b)
    else:
        tb = min(_round_up(batch_tile, 16), _round_up(b, 16))
    b_pad = _round_up(b, tb)
    if b_pad != b:
        x = jnp.pad(x, ((0, b_pad - b), (0, 0)))

    def resident(shape):
        # Constant block index -> DMA'd once, stays pinned in VMEM.
        return pl.BlockSpec(shape, lambda i: (0, 0))

    out = pl.pallas_call(
        _mlp_kernel,
        out_shape=jax.ShapeDtypeStruct((b_pad, out_size), jnp.bfloat16),
        grid=(b_pad // tb,),
        in_specs=[
            pl.BlockSpec((tb, in_size), lambda i: (i, 0)),   # x tiles stream
            resident((in_size, hid)),
            resident((1, hid)),
            resident((hid, hid)),
            resident((1, hid)),
            resident((hid, out_size)),
            resident((1, out_size)),
        ],
        # Unpadded (tb, out_size) block: last dim equals the full array dim,
        # so no 16x lane padding and no post-kernel slice pass.
        out_specs=pl.BlockSpec((tb, out_size), lambda i: (i, 0)),
        compiler_params=pltpu.CompilerParams(
            dimension_semantics=("parallel",),          # v7x: shard over 2 TCs
            vmem_limit_bytes=_vmem_limit_bytes(tb, in_size, hid, out_size)),
    )(x,
      prepared["w1"], prepared["b1"],
      prepared["w2"], prepared["b2"],
      prepared["w3"], prepared["b3"])

    return out[:b] if b_pad != b else out


# ----------------------------------------------------------------------------
# Init + pure-JAX reference.
# ----------------------------------------------------------------------------
def init_params(key, input_size, hidden_size, output_size):
    """Deterministic init mimicking PyTorch Linear's uniform(-1/sqrt(fan_in), +)."""
    ks = jax.random.split(key, 6)

    def lin(kw, kb, fan_in, fan_out):
        bound = 1.0 / jnp.sqrt(fan_in)
        w = jax.random.uniform(kw, (fan_in, fan_out), jnp.float32, -bound, bound)
        bb = jax.random.uniform(kb, (1, fan_out), jnp.float32, -bound, bound)
        return w, bb

    w1, b1 = lin(ks[0], ks[1], input_size, hidden_size)
    w2, b2 = lin(ks[2], ks[3], hidden_size, hidden_size)
    w3, b3 = lin(ks[4], ks[5], hidden_size, output_size)
    return {"w1": w1, "b1": b1, "w2": w2, "b2": b2, "w3": w3, "b3": b3}


def _reference_forward(x, p):
    """Pure-JAX reference with the same bf16-operand / f32-accumulate policy."""
    b = x.shape[0]
    x = x.reshape(b, -1).astype(jnp.bfloat16)
    w1 = p["w1"].astype(jnp.bfloat16)
    w2 = p["w2"].astype(jnp.bfloat16)
    w3 = p["w3"].astype(jnp.bfloat16)
    h1 = jnp.maximum(
        jnp.dot(x, w1, preferred_element_type=jnp.float32) + p["b1"], 0.0)
    h2 = jnp.maximum(
        jnp.dot(h1.astype(jnp.bfloat16), w2,
                preferred_element_type=jnp.float32) + p["b2"], 0.0)
    return jnp.dot(h2.astype(jnp.bfloat16), w3,
                   preferred_element_type=jnp.float32) + p["b3"]


if __name__ == "__main__":
    batch = 2
    state_shape = (4, 8)          # nn.Flatten -> input_size = 32
    input_size = 4 * 8
    hidden_size = 32
    output_size = 8

    key = jax.random.PRNGKey(0)
    k_x, k_p, k_x2 = jax.random.split(key, 3)

    params = init_params(k_p, input_size, hidden_size, output_size)
    prepared = prepare_params(params)     # one-time weight prep (hoisted)

    # Small demo batch (exercises Flatten + row padding up to one 16-row tile).
    x = jax.random.normal(k_x, (batch,) + state_shape, jnp.float32)
    out = jax.block_until_ready(network_forward(x, prepared))
    ref = _reference_forward(x, params)
    assert out.shape == (batch, output_size)
    assert out.dtype == jnp.bfloat16
    assert jnp.allclose(out.astype(jnp.float32), ref, atol=2e-2, rtol=2e-2)

    # Larger batch: auto-tile -> tb=256, 4 grid steps, pipelined + parallel.
    x2 = jax.random.normal(k_x2, (1024,) + state_shape, jnp.float32)
    out2 = jax.block_until_ready(network_forward(x2, prepared))
    ref2 = _reference_forward(x2, params)
    assert out2.shape == (1024, output_size)
    assert jnp.allclose(out2.astype(jnp.float32), ref2, atol=2e-2, rtol=2e-2)

    print("KERNEL_OK")
</pallas_src>

<mosaic_0001>
module attributes {stable_mosaic.version = 11 : i64} {
  func.func @_mlp_kernel(%arg0: i32, %arg1: memref<16x32xf32, #tpu.memory_space<vmem>>, %arg2: memref<32x32xbf16, #tpu.memory_space<vmem>>, %arg3: memref<1x32xf32, #tpu.memory_space<vmem>>, %arg4: memref<32x32xbf16, #tpu.memory_space<vmem>>, %arg5: memref<1x32xf32, #tpu.memory_space<vmem>>, %arg6: memref<32x8xbf16, #tpu.memory_space<vmem>>, %arg7: memref<1x8xf32, #tpu.memory_space<vmem>>, %arg8: memref<16x8xbf16, #tpu.memory_space<vmem>>) attributes {dimension_semantics = [#tpu.dimension_semantics<parallel>], iteration_bounds = array<i64: 1>, scalar_prefetch = 0 : i64, scratch_operands = 0 : i64, tpu.core_type = #tpu.core_type<tc>, window_params = [{transform_indices = @transform_0, window_bounds = array<i64: 16, 32>}, {pipeline_mode = #tpu.pipeline_mode<synchronous>, transform_indices = @transform_1, window_bounds = array<i64: 32, 32>}, {pipeline_mode = #tpu.pipeline_mode<synchronous>, transform_indices = @transform_2, window_bounds = array<i64: 1, 32>}, {pipeline_mode = #tpu.pipeline_mode<synchronous>, transform_indices = @transform_3, window_bounds = array<i64: 32, 32>}, {pipeline_mode = #tpu.pipeline_mode<synchronous>, transform_indices = @transform_4, window_bounds = array<i64: 1, 32>}, {pipeline_mode = #tpu.pipeline_mode<synchronous>, transform_indices = @transform_5, window_bounds = array<i64: 32, 8>}, {pipeline_mode = #tpu.pipeline_mode<synchronous>, transform_indices = @transform_6, window_bounds = array<i64: 1, 8>}, {transform_indices = @transform_7, window_bounds = array<i64: 16, 8>}]} {
    %c0 = arith.constant 0 : index
    %c0_0 = arith.constant 0 : index
    %0 = vector.load %arg1[%c0, %c0_0] : memref<16x32xf32, #tpu.memory_space<vmem>>, vector<16x32xf32>
    %1 = arith.truncf %0 : vector<16x32xf32> to vector<16x32xbf16>
    %c0_1 = arith.constant 0 : index
    %c0_2 = arith.constant 0 : index
    %2 = vector.load %arg2[%c0_1, %c0_2] : memref<32x32xbf16, #tpu.memory_space<vmem>>, vector<32x32xbf16>
    %cst = arith.constant dense<0.000000e+00> : vector<16x32xf32>
    %3 = tpu.matmul %1, %2, %cst {dimension_numbers = #tpu.dot_dimension_numbers<[1], [0], [0], [1], [0, 0, 1, 1], [], []>} : vector<16x32xbf16>, vector<32x32xbf16>, vector<16x32xf32> -> vector<16x32xf32>
    %c0_3 = arith.constant 0 : index
    %c0_4 = arith.constant 0 : index
    %4 = vector.load %arg3[%c0_3, %c0_4] : memref<1x32xf32, #tpu.memory_space<vmem>>, vector<1x32xf32>
    %5 = vector.broadcast %4 : vector<1x32xf32> to vector<16x32xf32>
    %6 = arith.addf %3, %5 : vector<16x32xf32>
    %cst_5 = arith.constant 0.000000e+00 : f32
    %7 = vector.broadcast %cst_5 : f32 to vector<16x32xf32>
    %8 = arith.maximumf %6, %7 : vector<16x32xf32>
    %9 = arith.truncf %8 : vector<16x32xf32> to vector<16x32xbf16>
    %c0_6 = arith.constant 0 : index
    %c0_7 = arith.constant 0 : index
    %10 = vector.load %arg4[%c0_6, %c0_7] : memref<32x32xbf16, #tpu.memory_space<vmem>>, vector<32x32xbf16>
    %cst_8 = arith.constant dense<0.000000e+00> : vector<16x32xf32>
    %11 = tpu.matmul %9, %10, %cst_8 {dimension_numbers = #tpu.dot_dimension_numbers<[1], [0], [0], [1], [0, 0, 1, 1], [], []>} : vector<16x32xbf16>, vector<32x32xbf16>, vector<16x32xf32> -> vector<16x32xf32>
    %c0_9 = arith.constant 0 : index
    %c0_10 = arith.constant 0 : index
    %12 = vector.load %arg5[%c0_9, %c0_10] : memref<1x32xf32, #tpu.memory_space<vmem>>, vector<1x32xf32>
    %13 = vector.broadcast %12 : vector<1x32xf32> to vector<16x32xf32>
    %14 = arith.addf %11, %13 : vector<16x32xf32>
    %cst_11 = arith.constant 0.000000e+00 : f32
    %15 = vector.broadcast %cst_11 : f32 to vector<16x32xf32>
    %16 = arith.maximumf %14, %15 : vector<16x32xf32>
    %17 = arith.truncf %16 : vector<16x32xf32> to vector<16x32xbf16>
    %c0_12 = arith.constant 0 : index
    %c0_13 = arith.constant 0 : index
    %18 = vector.load %arg6[%c0_12, %c0_13] : memref<32x8xbf16, #tpu.memory_space<vmem>>, vector<32x8xbf16>
    %cst_14 = arith.constant dense<0.000000e+00> : vector<16x8xf32>
    %19 = tpu.matmul %17, %18, %cst_14 {dimension_numbers = #tpu.dot_dimension_numbers<[1], [0], [0], [1], [0, 0, 1, 1], [], []>} : vector<16x32xbf16>, vector<32x8xbf16>, vector<16x8xf32> -> vector<16x8xf32>
    %c0_15 = arith.constant 0 : index
    %c0_16 = arith.constant 0 : index
    %20 = vector.load %arg7[%c0_15, %c0_16] : memref<1x8xf32, #tpu.memory_space<vmem>>, vector<1x8xf32>
    %21 = vector.broadcast %20 : vector<1x8xf32> to vector<16x8xf32>
    %22 = arith.addf %19, %21 : vector<16x8xf32>
    %23 = arith.truncf %22 : vector<16x8xf32> to vector<16x8xbf16>
    %c0_17 = arith.constant 0 : index
    %c0_18 = arith.constant 0 : index
    %24 = vector.load %arg8[%c0_17, %c0_18] : memref<16x8xbf16, #tpu.memory_space<vmem>>, vector<16x8xbf16>
    tpu.vector_store %arg8[%c0_17, %c0_18], %23 {strides = array<i32>} : memref<16x8xbf16, #tpu.memory_space<vmem>>, vector<16x8xbf16>,
    return
  }
  func.func @transform_0(%arg0: i32) -> (i32, i32) {
    %c0_i32 = arith.constant 0 : i32
    %c0_i32_0 = arith.constant 0 : i32
    return %arg0, %c0_i32 : i32, i32
  }
  func.func @transform_1(%arg0: i32) -> (i32, i32) {
    %c0_i32 = arith.constant 0 : i32
    %c0_i32_0 = arith.constant 0 : i32
    %c0_i32_1 = arith.constant 0 : i32
    return %c0_i32, %c0_i32_0 : i32, i32
  }
  func.func @transform_2(%arg0: i32) -> (i32, i32) {
    %c0_i32 = arith.constant 0 : i32
    %c0_i32_0 = arith.constant 0 : i32
    %c0_i32_1 = arith.constant 0 : i32
    return %c0_i32, %c0_i32_0 : i32, i32
  }
  func.func @transform_3(%arg0: i32) -> (i32, i32) {
    %c0_i32 = arith.constant 0 : i32
    %c0_i32_0 = arith.constant 0 : i32
    %c0_i32_1 = arith.constant 0 : i32
    return %c0_i32, %c0_i32_0 : i32, i32
  }
  func.func @transform_4(%arg0: i32) -> (i32, i32) {
    %c0_i32 = arith.constant 0 : i32
    %c0_i32_0 = arith.constant 0 : i32
    %c0_i32_1 = arith.constant 0 : i32
    return %c0_i32, %c0_i32_0 : i32, i32
  }
  func.func @transform_5(%arg0: i32) -> (i32, i32) {
    %c0_i32 = arith.constant 0 : i32
    %c0_i32_0 = arith.constant 0 : i32
    %c0_i32_1 = arith.constant 0 : i32
    return %c0_i32, %c0_i32_0 : i32, i32
  }
  func.func @transform_6(%arg0: i32) -> (i32, i32) {
    %c0_i32 = arith.constant 0 : i32
    %c0_i32_0 = arith.constant 0 : i32
    %c0_i32_1 = arith.constant 0 : i32
    return %c0_i32, %c0_i32_0 : i32, i32
  }
  func.func @transform_7(%arg0: i32) -> (i32, i32) {
    %c0_i32 = arith.constant 0 : i32
    %c0_i32_0 = arith.constant 0 : i32
    return %arg0, %c0_i32 : i32, i32
  }
}

</mosaic_0001>

<llo_original>
// kernel: tpu_custom_call.1
$region0: #{tpu_custom_call.1}
  #allocation0 [shape = 'u32[]', space=smem, size = 0x4, offset = 0x4, fixed_abs, tag = 'smem constant byte address 0x4 - core index']
  #allocation1 [shape = 'u32[144,128]{1,0:T(1,128)}', space=vmem, size = 0x12000, scoped, tag = 'internal scratch']
  %s0 = inlined_call_operand.vmem [shape: f32[16,32], index: 0, kind: input, shape index: {}]
  %s1 = inlined_call_operand.hbm [shape: bf16[32,32], index: 1, kind: input, shape index: {}]
  %s2 = inlined_call_operand.vmem [shape: f32[1,32], index: 2, kind: input, shape index: {}]
  %s3 = inlined_call_operand.hbm [shape: bf16[32,32], index: 3, kind: input, shape index: {}]
  %s4 = inlined_call_operand.vmem [shape: f32[1,32], index: 4, kind: input, shape index: {}]
  %s5 = inlined_call_operand.vmem [shape: bf16[32,8], index: 5, kind: input, shape index: {}]
  %s6 = inlined_call_operand.vmem [shape: f32[1,8], index: 6, kind: input, shape index: {}]
  %s7 = inlined_call_operand.vmem [shape: bf16[16,8], index: 7, kind: output, shape index: {}]
  %s8 = sld [smem:[#allocation0]]
  $region46: #{tpu_custom_call.1} parent=0
    _
  %s10 = ssub.s32 1, %s8
  %s11 = scalar_select 0, %s10, %s8
  $region1: #{tpu_custom_call.1} parent=0
    #allocation2 [shape = 'u8[8192]{0}', space=vmem, size = 0x2000, scoped, tag = 'input window, operand 1, single buffered']
    #allocation3 [shape = 's32[1]{0}', space=sflag, size = 0x4, scoped, tag = 'scoped memory for tpu_custom_call.1']
    #allocation4 [shape = 'u8[8192]{0}', space=vmem, size = 0x2000, scoped, tag = 'input window, operand 3, single buffered']
    #allocation5 [shape = 's32[1]{0}', space=sflag, size = 0x4, scoped, tag = 'scoped memory for tpu_custom_call.1']
    %12 = vsyncpa [#allocation3], 0
    %13 = vsyncpa [#allocation5], 0
    // Predicated region
    $region2: #{tpu_custom_call.1} parent=1 // pred_check
      _
    $region3: #{tpu_custom_call.1} parent=1 // pred_check_branch
      %15 = sbr.rel (0) target = $region5
    $region4: #{tpu_custom_call.1} parent=1 // pred_region
      _
    $region5: #{tpu_custom_call.1} parent=1 // pred_fallthru
      _
    // Predicated region
    $region6: #{tpu_custom_call.1} parent=1 // pred_check
      _
    $region7: #{tpu_custom_call.1} parent=1 // pred_check_branch
      %17 = sbr.rel (0) target = $region9
    $region8: #{tpu_custom_call.1} parent=1 // pred_region
      %s19 = ssub.s32 256, 256
      %20 = vsyncadd [#allocation3], %s19
      %s21 = sshll.u32 [#allocation2], 4
      %s22 = int_to_ptr.vmem [resolvable:$true] %s21
      %27 = dma.hbm_to_vmem [thread:$0]  %s1, 256, %s22, [#allocation3], 64, 64, 4
    $region9: #{tpu_custom_call.1} parent=1 // pred_fallthru
      _
    // Predicated region
    $region10: #{tpu_custom_call.1} parent=1 // pred_check
      _
    $region11: #{tpu_custom_call.1} parent=1 // pred_check_branch
      %29 = sbr.rel (0) target = $region13
    $region12: #{tpu_custom_call.1} parent=1 // pred_region
      _
    $region13: #{tpu_custom_call.1} parent=1 // pred_fallthru
      _
    // Predicated region
    $region14: #{tpu_custom_call.1} parent=1 // pred_check
      _
    $region15: #{tpu_custom_call.1} parent=1 // pred_check_branch
      %31 = sbr.rel (0) target = $region17
    $region16: #{tpu_custom_call.1} parent=1 // pred_region
      %s33 = ssub.s32 256, 256
      %34 = vsyncadd [#allocation5], %s33
      %s35 = sshll.u32 [#allocation4], 4
      %s36 = int_to_ptr.vmem [resolvable:$true] %s35
      %41 = dma.hbm_to_vmem [thread:$0]  %s3, 256, %s36, [#allocation5], 64, 64, 4
    $region17: #{tpu_custom_call.1} parent=1 // pred_fallthru
      _
    // Predicated region
    $region18: #{tpu_custom_call.1} parent=1 // pred_check
      _
    $region19: #{tpu_custom_call.1} parent=1 // pred_check_branch
      %43 = sbr.rel (0) target = $region21
    $region20: #{tpu_custom_call.1} parent=1 // pred_region
      _
    $region21: #{tpu_custom_call.1} parent=1 // pred_fallthru
      _
    // Predicated region
    $region22: #{tpu_custom_call.1} parent=1 // pred_check
      _
    $region23: #{tpu_custom_call.1} parent=1 // pred_check_branch
      %45 = sbr.rel (0) target = $region25
    $region24: #{tpu_custom_call.1} parent=1 // pred_region
      _
    $region25: #{tpu_custom_call.1} parent=1 // pred_fallthru
      _
    // Predicated region
    $region26: #{tpu_custom_call.1} parent=1 // pred_check
      _
    $region27: #{tpu_custom_call.1} parent=1 // pred_check_branch
      %47 = sbr.rel (0) target = $region29
    $region28: #{tpu_custom_call.1} parent=1 // pred_region
      _
    $region29: #{tpu_custom_call.1} parent=1 // pred_fallthru
      _
    // Predicated region
    $region30: #{tpu_custom_call.1} parent=1 // pred_check
      _
    $region31: #{tpu_custom_call.1} parent=1 // pred_check_branch
      %49 = sbr.rel (0) target = $region33
    $region32: #{tpu_custom_call.1} parent=1 // pred_region
      %50 = dma.done [#allocation3], 256
    $region33: #{tpu_custom_call.1} parent=1 // pred_fallthru
      _
    // Predicated region
    $region34: #{tpu_custom_call.1} parent=1 // pred_check
      _
    $region35: #{tpu_custom_call.1} parent=1 // pred_check_branch
      %52 = sbr.rel (0) target = $region37
    $region36: #{tpu_custom_call.1} parent=1 // pred_region
      %53 = dma.done [#allocation5], 256
    $region37: #{tpu_custom_call.1} parent=1 // pred_fallthru
      _
    %v55 = vld [vmem:[%s0] sm:$0xff]
    %v56 = vld [vmem:[%s0 + $0x8] sm:$0xff]
    %v57 = vpack.c.bf16 %v56, %v55
    %v58 = vld [vmem:[#allocation2] sm:$0xf]
    %v59 = vld [vmem:[#allocation2 + $0x4] sm:$0xf]
    %v60 = vld [vmem:[#allocation2 + $0x8] sm:$0xf]
    %v61 = vld [vmem:[#allocation2 + $0xc] sm:$0xf]
    %v62 = vld [vmem:[%s2] sm:$0x1]
    %v64 = vlaneseq
    %v65 = vshrl.u32 %v64, 7
    %v66 = vsub.s32 0, %v65
    %v67 = vrot.slane %v62, %v66
    %v73 = vunpack.c.l.b16 %v58
    %v74 = vunpack.c.l.b16 %v59
    %v75 = vunpack.c.l.b16 %v60
    %v76 = vunpack.c.l.b16 %v61
    %v77 = vpack.c.b16 %v74, %v73
    %v78 = vpack.c.b16 %v76, %v75
    %vm81 = vcmask 261120
    %v83 = vsel %vm81, %v57, 0
    %85 = vmatprep.subr.bf16.mxu0 0
    %86 = vmatpush1.bf16.msra.mxu0 0
    %87 = vmatprep.subr.bf16.mxu0 0
    %88 = vmatpush1.bf16.msra.mxu0 0
    %89 = vmatprep.subr.bf16.mxu0 0
    %90 = vmatpush1.bf16.msra.mxu0 0
    %91 = vmatprep.subr.bf16.mxu0 0
    %92 = vmatpush1.bf16.msra.mxu0 0
    %93 = vmatprep.subr.bf16.mxu0 0
    %94 = vmatpush1.bf16.msra.mxu0 0
    %95 = vmatprep.subr.bf16.mxu0 0
    %96 = vmatpush1.bf16.msra.mxu0 0
    %97 = vmatprep.subr.bf16.mxu0 0
    %98 = vmatpush1.bf16.msra.mxu0 %v78
    %99 = vmatprep.subr.bf16.mxu0 0
    %100 = vmatpush1.bf16.msra.mxu0 %v77
    %101 = vmatprep.subr.bf16.mxu0 0
    %102 = vmatpush2.bf16.msra.mxu0 0
    %103 = vmatprep.subr.bf16.mxu0 0
    %104 = vmatpush2.bf16.msra.mxu0 0
    %105 = vmatprep.subr.bf16.mxu0 0
    %106 = vmatpush2.bf16.msra.mxu0 0
    %107 = vmatprep.subr.bf16.mxu0 0
    %108 = vmatpush2.bf16.msra.mxu0 0
    %109 = vmatprep.subr.bf16.mxu0 0
    %110 = vmatpush2.bf16.msra.mxu0 0
    %111 = vmatprep.subr.bf16.mxu0 0
    %112 = vmatpush2.bf16.msra.mxu0 0
    %113 = vmatprep.subr.bf16.mxu0 0
    %114 = vmatpush2.bf16.msra.mxu0 0
    %115 = vmatprep.subr.bf16.mxu0 0
    %116 = vmatpush2.bf16.msra.mxu0 0
    %117 = vmatprep.mubr.bf16.mxu0 0
    %118 = vmatmul.mubr.bf16.gmra.mxu0 %v83
    %v119 = vpop.f32.mrf.mxu0
    %v120 = vadd.f32 %v67, %v119
    %v121 = vpop.f32.mrf.mxu0
    %v122 = vpop.f32.mrf.mxu0
    %v123 = vadd.f32 %v67, %v122
    %v124 = vpop.f32.mrf.mxu0
    %125 = vdwg.mxu0
    %v126 = vmax.f32 %v120, 0.0
    %v127 = vmax.f32 %v123, 0.0
    %v128 = vpack.c.bf16 %v127, %v126
    %v129 = vld [vmem:[#allocation4] sm:$0xf]
    %v130 = vld [vmem:[#allocation4 + $0x4] sm:$0xf]
    %v131 = vld [vmem:[#allocation4 + $0x8] sm:$0xf]
    %v132 = vld [vmem:[#allocation4 + $0xc] sm:$0xf]
    %v133 = vld [vmem:[%s4] sm:$0x1]
    %v135 = vlaneseq
    %v136 = vshrl.u32 %v135, 7
    %v137 = vsub.s32 0, %v136
    %v138 = vrot.slane %v133, %v137
    %v144 = vunpack.c.l.b16 %v129
    %v145 = vunpack.c.l.b16 %v130
    %v146 = vunpack.c.l.b16 %v131
    %v147 = vunpack.c.l.b16 %v132
    %v148 = vpack.c.b16 %v145, %v144
    %v149 = vpack.c.b16 %v147, %v146
    %v153 = vsel %vm81, %v128, 0
    %155 = vmatprep.subr.bf16.mxu0 0
    %156 = vmatpush1.bf16.msra.mxu0 0
    %157 = vmatprep.subr.bf16.mxu0 0
    %158 = vmatpush1.bf16.msra.mxu0 0
    %159 = vmatprep.subr.bf16.mxu0 0
    %160 = vmatpush1.bf16.msra.mxu0 0
    %161 = vmatprep.subr.bf16.mxu0 0
    %162 = vmatpush1.bf16.msra.mxu0 0
    %163 = vmatprep.subr.bf16.mxu0 0
    %164 = vmatpush1.bf16.msra.mxu0 0
    %165 = vmatprep.subr.bf16.mxu0 0
    %166 = vmatpush1.bf16.msra.mxu0 0
    %167 = vmatprep.subr.bf16.mxu0 0
    %168 = vmatpush1.bf16.msra.mxu0 %v149
    %169 = vmatprep.subr.bf16.mxu0 0
    %170 = vmatpush1.bf16.msra.mxu0 %v148
    %171 = vmatprep.subr.bf16.mxu0 0
    %172 = vmatpush2.bf16.msra.mxu0 0
    %173 = vmatprep.subr.bf16.mxu0 0
    %174 = vmatpush2.bf16.msra.mxu0 0
    %175 = vmatprep.subr.bf16.mxu0 0
    %176 = vmatpush2.bf16.msra.mxu0 0
    %177 = vmatprep.subr.bf16.mxu0 0
    %178 = vmatpush2.bf16.msra.mxu0 0
    %179 = vmatprep.subr.bf16.mxu0 0
    %180 = vmatpush2.bf16.msra.mxu0 0
    %181 = vmatprep.subr.bf16.mxu0 0
    %182 = vmatpush2.bf16.msra.mxu0 0
    %183 = vmatprep.subr.bf16.mxu0 0
    %184 = vmatpush2.bf16.msra.mxu0 0
    %185 = vmatprep.subr.bf16.mxu0 0
    %186 = vmatpush2.bf16.msra.mxu0 0
    %187 = vmatprep.mubr.bf16.mxu0 0
    %188 = vmatmul.mubr.bf16.gmra.mxu0 %v153
    %v189 = vpop.f32.mrf.mxu0
    %v190 = vadd.f32 %v138, %v189
    %v191 = vpop.f32.mrf.mxu0
    %v192 = vpop.f32.mrf.mxu0
    %v193 = vadd.f32 %v138, %v192
    %v194 = vpop.f32.mrf.mxu0
    %195 = vdwg.mxu0
    %v196 = vmax.f32 %v190, 0.0
    %v197 = vmax.f32 %v193, 0.0
    %v198 = vpack.c.bf16 %v197, %v196
    %v199 = vld [vmem:[%s5] sm:$0xf]
    %v200 = vld [vmem:[%s5 + $0x4] sm:$0xf]
    %v201 = vld [vmem:[%s5 + $0x8] sm:$0xf]
    %v202 = vld [vmem:[%s5 + $0xc] sm:$0xf]
    %v203 = vld [vmem:[%s6] sm:$0x1]
    %v205 = vlaneseq
    %v206 = vshrl.u32 %v205, 7
    %v207 = vsub.s32 0, %v206
    %v208 = vrot.slane %v203, %v207
    %v214 = vunpack.c.l.b16 %v199
    %v215 = vunpack.c.l.b16 %v200
    %v216 = vunpack.c.l.b16 %v201
    %v217 = vunpack.c.l.b16 %v202
    %v218 = vpack.c.b16 %v215, %v214
    %v219 = vpack.c.b16 %v217, %v216
    %v223 = vsel %vm81, %v198, 0
    %225 = vmatprep.subr.bf16.mxu0 0
    %226 = vmatpush1.bf16.msra.mxu0 0
    %227 = vmatprep.subr.bf16.mxu0 0
    %228 = vmatpush1.bf16.msra.mxu0 0
    %229 = vmatprep.subr.bf16.mxu0 0
    %230 = vmatpush1.bf16.msra.mxu0 0
    %231 = vmatprep.subr.bf16.mxu0 0
    %232 = vmatpush1.bf16.msra.mxu0 0
    %233 = vmatprep.subr.bf16.mxu0 0
    %234 = vmatpush1.bf16.msra.mxu0 0
    %235 = vmatprep.subr.bf16.mxu0 0
    %236 = vmatpush1.bf16.msra.mxu0 0
    %237 = vmatprep.subr.bf16.mxu0 0
    %238 = vmatpush1.bf16.msra.mxu0 %v219
    %239 = vmatprep.subr.bf16.mxu0 0
    %240 = vmatpush1.bf16.msra.mxu0 %v218
    %241 = vmatprep.subr.bf16.mxu0 0
    %242 = vmatpush2.bf16.msra.mxu0 0
    %243 = vmatprep.subr.bf16.mxu0 0
    %244 = vmatpush2.bf16.msra.mxu0 0
    %245 = vmatprep.subr.bf16.mxu0 0
    %246 = vmatpush2.bf16.msra.mxu0 0
    %247 = vmatprep.subr.bf16.mxu0 0
    %248 = vmatpush2.bf16.msra.mxu0 0
    %249 = vmatprep.subr.bf16.mxu0 0
    %250 = vmatpush2.bf16.msra.mxu0 0
    %251 = vmatprep.subr.bf16.mxu0 0
    %252 = vmatpush2.bf16.msra.mxu0 0
    %253 = vmatprep.subr.bf16.mxu0 0
    %254 = vmatpush2.bf16.msra.mxu0 0
    %255 = vmatprep.subr.bf16.mxu0 0
    %256 = vmatpush2.bf16.msra.mxu0 0
    %257 = vmatprep.mubr.bf16.mxu0 0
    %258 = vmatmul.mubr.bf16.gmra.mxu0 %v223
    %v259 = vpop.f32.mrf.mxu0
    %v260 = vadd.f32 %v208, %v259
    %v261 = vpop.f32.mrf.mxu0
    %v262 = vpop.f32.mrf.mxu0
    %v263 = vadd.f32 %v208, %v262
    %v264 = vpop.f32.mrf.mxu0
    %265 = vdwg.mxu0
    %v266 = vpack.c.bf16 %v263, %v260
    %v268 = vunpack.c.l.b16 %v266
    %v269 = vunpack.c.h.b16 %v266
    %v270 = vpack.c.b16 %v268, %v268
    %v271 = vpack.c.b16 %v269, %v269
    %vm274 = vcmask 60416
    %275 = vst.msk [vmem:[%s7] sm:$0xf] %vm274, %v270
    %276 = vst.msk [vmem:[%s7 + $0x4] sm:$0xf] %vm274, %v271
    // Predicated region
    $region38: #{tpu_custom_call.1} parent=1 // pred_check
      _
    $region39: #{tpu_custom_call.1} parent=1 // pred_check_branch
      %278 = sbr.rel (0) target = $region41
    $region40: #{tpu_custom_call.1} parent=1 // pred_region
      _
    $region41: #{tpu_custom_call.1} parent=1 // pred_fallthru
      _
    // Predicated region
    $region42: #{tpu_custom_call.1} parent=1 // pred_check
      _
    $region43: #{tpu_custom_call.1} parent=1 // pred_check_branch
      %280 = sbr.rel (0) target = $region45
    $region44: #{tpu_custom_call.1} parent=1 // pred_region
      _
    $region45: #{tpu_custom_call.1} parent=1 // pred_fallthru
      _
    %281 = vsyncpa [#allocation3], 1
    %282 = vsyncpa [#allocation5], 1

</llo_original>
